<compile_context>
chip_gen: v7x
topology: tpu7x:2x2x1
jax: 0.10.0
libtpu: 0.0.40
codegen_flags: <defaults>
</compile_context>

<pallas_src>
import functools

import jax
import jax.numpy as jnp
from jax import lax
from jax.experimental import pallas as pl
from jax.experimental.pallas import tpu as pltpu

_LANE = 128
_SUBLANE = 8
_MAX_TILE_ROWS = 2048   # 2048 * 128 * 4B = 1 MiB per input block per buffer


def _round_up(x, m):
    return ((x + m - 1) // m) * m


def _masked_bce_kernel(pred_ref, target_ref, mask_ref, out_ref,
                       loss_acc, mask_acc, *, n_valid, has_pad):
    i = pl.program_id(0)
    tr, lanes = pred_ref.shape
    groups = tr // _SUBLANE

    @pl.when(i == 0)
    def _():
        loss_acc[...] = jnp.zeros_like(loss_acc)
        mask_acc[...] = jnp.zeros_like(mask_acc)

    p = pred_ref[...].astype(jnp.float32)
    t = target_ref[...].astype(jnp.float32)
    m = mask_ref[...].astype(jnp.float32)

    x = p * m
    # Numerically stable BCE-with-logits: max(x,0) - x*t + log1p(exp(-|x|))
    elem = jnp.maximum(x, 0.0) - x * t + jnp.log1p(jnp.exp(-jnp.abs(x)))

    if has_pad:
        # Validity mask for the zero-padding, computed in-kernel (no extra HBM
        # input). Pad elements would otherwise each add log(2).
        row_ids = lax.broadcasted_iota(jnp.int32, (tr, lanes), 0)
        col_ids = lax.broadcasted_iota(jnp.int32, (tr, lanes), 1)
        flat = row_ids * lanes + col_ids
        valid = flat < (n_valid - i * (tr * lanes))
        elem = jnp.where(valid, elem, 0.0)

    # Reduce each tile to one (8, 128) vreg before touching scratch: the
    # reshape does not cross (8,128) tile boundaries and the leading-axis sum
    # is pure elementwise vreg adds (VALU), no cross-lane movement.
    loss_acc[...] += jnp.sum(elem.reshape(groups, _SUBLANE, lanes), axis=0)
    mask_acc[...] += jnp.sum(m.reshape(groups, _SUBLANE, lanes), axis=0)

    @pl.when(i == pl.num_programs(0) - 1)
    def _():
        loss_sum = jnp.sum(loss_acc[...])
        mask_sum = jnp.sum(mask_acc[...])
        out_ref[0, 0] = loss_sum / mask_sum


def masked_mse_loss(pred, target, mask):
    """loss = BCEWithLogitsLoss(reduction='sum')(pred*mask, target) / sum(mask)."""
    assert pred.shape == target.shape == mask.shape
    n = pred.size
    rows = pl.cdiv(n, _LANE)
    tile_rows = min(_MAX_TILE_ROWS, _round_up(rows, _SUBLANE))
    rows_p = _round_up(rows, tile_rows)
    total = rows_p * _LANE

    def prep(a):
        a = a.reshape(-1)
        return jnp.pad(a, (0, total - n)).reshape(rows_p, _LANE)

    p2, t2, m2 = prep(pred), prep(target), prep(mask)

    grid = (rows_p // tile_rows,)
    block = pl.BlockSpec((tile_rows, _LANE), lambda i: (i, 0))
    itemsize = jnp.dtype(pred.dtype).itemsize

    out = pl.pallas_call(
        functools.partial(_masked_bce_kernel, n_valid=n, has_pad=(n != total)),
        out_shape=jax.ShapeDtypeStruct((1, 1), jnp.float32),
        grid=grid,
        in_specs=[block, block, block],
        out_specs=pl.BlockSpec((1, 1), lambda i: (0, 0),
                               memory_space=pltpu.MemorySpace.SMEM),
        scratch_shapes=[pltpu.VMEM((_SUBLANE, _LANE), jnp.float32),
                        pltpu.VMEM((_SUBLANE, _LANE), jnp.float32)],
        compiler_params=pltpu.CompilerParams(
            dimension_semantics=("arbitrary",)),
        cost_estimate=pl.CostEstimate(
            flops=10 * total,
            transcendentals=2 * total,
            bytes_accessed=3 * total * itemsize + 4),
    )(p2, t2, m2)
    return out[0, 0]


def _reference(pred, target, mask):
    # Pure-JAX reference of the PyTorch forward (stable BCE-with-logits, sum).
    x = (pred * mask).astype(jnp.float32)
    t = target.astype(jnp.float32)
    elem = jnp.maximum(x, 0.0) - x * t + jnp.log1p(jnp.exp(-jnp.abs(x)))
    return jnp.sum(elem) / jnp.sum(mask.astype(jnp.float32))


if __name__ == "__main__":
    key = jax.random.PRNGKey(0)
    k_p, k_t, k_m = jax.random.split(key, 3)

    batch, seq_len = 2, 8
    pred = jax.random.normal(k_p, (batch, seq_len), dtype=jnp.float32)
    target = jax.random.bernoulli(k_t, 0.5, (batch, seq_len)).astype(jnp.float32)
    mask = jax.random.bernoulli(k_m, 0.7, (batch, seq_len)).astype(jnp.float32)
    mask = mask.at[0, 0].set(1.0)   # guarantee sum(mask) > 0

    loss = masked_mse_loss(pred, target, mask)
    loss = jax.block_until_ready(loss)

    ref = _reference(pred, target, mask)
    assert loss.shape == ()
    assert jnp.allclose(loss, ref, atol=1e-5, rtol=1e-5), (loss, ref)

    print("KERNEL_OK")
</pallas_src>

<mosaic_0001>
module attributes {stable_mosaic.version = 11 : i64} {
  func.func @_masked_bce_kernel(%arg0: i32, %arg1: memref<8x128xf32, #tpu.memory_space<vmem>>, %arg2: memref<8x128xf32, #tpu.memory_space<vmem>>, %arg3: memref<8x128xf32, #tpu.memory_space<vmem>>, %arg4: memref<1x1xf32, #tpu.memory_space<smem>>, %arg5: memref<8x128xf32, #tpu.memory_space<vmem>>, %arg6: memref<8x128xf32, #tpu.memory_space<vmem>>) attributes {dimension_semantics = [#tpu.dimension_semantics<arbitrary>], iteration_bounds = array<i64: 1>, scalar_prefetch = 0 : i64, scratch_operands = 2 : i64, tpu.core_type = #tpu.core_type<tc>, window_params = [{transform_indices = @transform_0, window_bounds = array<i64: 8, 128>}, {transform_indices = @transform_1, window_bounds = array<i64: 8, 128>}, {transform_indices = @transform_2, window_bounds = array<i64: 8, 128>}, {transform_indices = @transform_3, window_bounds = array<i64: 1, 1>}]} {
    %c0_i32 = arith.constant 0 : i32
    %0 = arith.cmpi eq, %arg0, %c0_i32 : i32
    %1 = arith.extui %0 : i1 to i32
    %c0_i32_0 = arith.constant 0 : i32
    %2 = arith.cmpi ne, %1, %c0_i32_0 : i32
    scf.if %2 {
      %cst_20 = arith.constant 0.000000e+00 : f32
      %41 = vector.broadcast %cst_20 : f32 to vector<8x128xf32>
      %c0_21 = arith.constant 0 : index
      %c0_22 = arith.constant 0 : index
      %42 = vector.load %arg5[%c0_21, %c0_22] : memref<8x128xf32, #tpu.memory_space<vmem>>, vector<8x128xf32>
      tpu.vector_store %arg5[%c0_21, %c0_22], %41 {strides = array<i32>} : memref<8x128xf32, #tpu.memory_space<vmem>>, vector<8x128xf32>,
      %cst_23 = arith.constant 0.000000e+00 : f32
      %43 = vector.broadcast %cst_23 : f32 to vector<8x128xf32>
      %c0_24 = arith.constant 0 : index
      %c0_25 = arith.constant 0 : index
      %44 = vector.load %arg6[%c0_24, %c0_25] : memref<8x128xf32, #tpu.memory_space<vmem>>, vector<8x128xf32>
      tpu.vector_store %arg6[%c0_24, %c0_25], %43 {strides = array<i32>} : memref<8x128xf32, #tpu.memory_space<vmem>>, vector<8x128xf32>,
    } else {
    }
    %c0 = arith.constant 0 : index
    %c0_1 = arith.constant 0 : index
    %3 = vector.load %arg1[%c0, %c0_1] : memref<8x128xf32, #tpu.memory_space<vmem>>, vector<8x128xf32>
    %c0_2 = arith.constant 0 : index
    %c0_3 = arith.constant 0 : index
    %4 = vector.load %arg2[%c0_2, %c0_3] : memref<8x128xf32, #tpu.memory_space<vmem>>, vector<8x128xf32>
    %c0_4 = arith.constant 0 : index
    %c0_5 = arith.constant 0 : index
    %5 = vector.load %arg3[%c0_4, %c0_5] : memref<8x128xf32, #tpu.memory_space<vmem>>, vector<8x128xf32>
    %6 = arith.mulf %3, %5 : vector<8x128xf32>
    %cst = arith.constant 0.000000e+00 : f32
    %7 = vector.broadcast %cst : f32 to vector<8x128xf32>
    %8 = arith.maximumf %6, %7 : vector<8x128xf32>
    %9 = arith.mulf %6, %4 : vector<8x128xf32>
    %10 = arith.subf %8, %9 : vector<8x128xf32>
    %11 = math.absf %6 : vector<8x128xf32>
    %cst_6 = arith.constant 0.000000e+00 : f32
    %12 = vector.broadcast %cst_6 : f32 to vector<8x128xf32>
    %13 = arith.subf %12, %11 : vector<8x128xf32>
    %14 = math.exp %13 : vector<8x128xf32>
    %15 = math.log1p %14 : vector<8x128xf32>
    %16 = arith.addf %10, %15 : vector<8x128xf32>
    %17 = tpu.iota {dimensions = array<i32: 0>} : vector<8x128xi32>
    %18 = tpu.iota {dimensions = array<i32: 1>} : vector<8x128xi32>
    %c128_i32 = arith.constant 128 : i32
    %19 = vector.broadcast %c128_i32 : i32 to vector<8x128xi32>
    %20 = arith.muli %17, %19 : vector<8x128xi32>
    %21 = arith.addi %20, %18 : vector<8x128xi32>
    %c1024_i32 = arith.constant 1024 : i32
    %22 = arith.muli %arg0, %c1024_i32 : i32
    %c16_i32 = arith.constant 16 : i32
    %23 = arith.subi %c16_i32, %22 : i32
    %24 = vector.broadcast %23 : i32 to vector<8x128xi32>
    %25 = arith.cmpi slt, %21, %24 : vector<8x128xi32>
    %cst_7 = arith.constant 0.000000e+00 : f32
    %26 = vector.broadcast %cst_7 : f32 to vector<8x128xf32>
    %27 = arith.select %25, %16, %26 : vector<8x128xi1>, vector<8x128xf32>
    %c0_8 = arith.constant 0 : index
    %c0_9 = arith.constant 0 : index
    %28 = vector.load %arg5[%c0_8, %c0_9] : memref<8x128xf32, #tpu.memory_space<vmem>>, vector<8x128xf32>
    %29 = vector.shape_cast %27 : vector<8x128xf32> to vector<1x8x128xf32>
    %cst_10 = arith.constant dense<0.000000e+00> : vector<8x128xf32>
    %30 = vector.multi_reduction <add>, %29, %cst_10 [0] : vector<1x8x128xf32> to vector<8x128xf32>
    %31 = arith.addf %28, %30 : vector<8x128xf32>
    %c0_11 = arith.constant 0 : index
    %c0_12 = arith.constant 0 : index
    %32 = vector.load %arg5[%c0_11, %c0_12] : memref<8x128xf32, #tpu.memory_space<vmem>>, vector<8x128xf32>
    tpu.vector_store %arg5[%c0_11, %c0_12], %31 {strides = array<i32>} : memref<8x128xf32, #tpu.memory_space<vmem>>, vector<8x128xf32>,
    %c0_13 = arith.constant 0 : index
    %c0_14 = arith.constant 0 : index
    %33 = vector.load %arg6[%c0_13, %c0_14] : memref<8x128xf32, #tpu.memory_space<vmem>>, vector<8x128xf32>
    %34 = vector.shape_cast %5 : vector<8x128xf32> to vector<1x8x128xf32>
    %cst_15 = arith.constant dense<0.000000e+00> : vector<8x128xf32>
    %35 = vector.multi_reduction <add>, %34, %cst_15 [0] : vector<1x8x128xf32> to vector<8x128xf32>
    %36 = arith.addf %33, %35 : vector<8x128xf32>
    %c0_16 = arith.constant 0 : index
    %c0_17 = arith.constant 0 : index
    %37 = vector.load %arg6[%c0_16, %c0_17] : memref<8x128xf32, #tpu.memory_space<vmem>>, vector<8x128xf32>
    tpu.vector_store %arg6[%c0_16, %c0_17], %36 {strides = array<i32>} : memref<8x128xf32, #tpu.memory_space<vmem>>, vector<8x128xf32>,
    %c0_i32_18 = arith.constant 0 : i32
    %38 = arith.cmpi eq, %arg0, %c0_i32_18 : i32
    %39 = arith.extui %38 : i1 to i32
    %c0_i32_19 = arith.constant 0 : i32
    %40 = arith.cmpi ne, %39, %c0_i32_19 : i32
    scf.if %40 {
      %c0_20 = arith.constant 0 : index
      %c0_21 = arith.constant 0 : index
      %41 = vector.load %arg5[%c0_20, %c0_21] : memref<8x128xf32, #tpu.memory_space<vmem>>, vector<8x128xf32>
      %42 = vector.shape_cast %41 : vector<8x128xf32> to vector<1x8x128xf32>
      %cst_22 = arith.constant dense<0.000000e+00> : vector<1xf32>
      %43 = vector.multi_reduction <add>, %42, %cst_22 [1, 2] : vector<1x8x128xf32> to vector<1xf32>
      %44 = vector.shape_cast %43 : vector<1xf32> to vector<1x1x1xf32>
      %45 = vector.extract %44[0, 0, 0] : f32 from vector<1x1x1xf32>
      %c0_23 = arith.constant 0 : index
      %c0_24 = arith.constant 0 : index
      %46 = vector.load %arg6[%c0_23, %c0_24] : memref<8x128xf32, #tpu.memory_space<vmem>>, vector<8x128xf32>
      %47 = vector.shape_cast %46 : vector<8x128xf32> to vector<1x8x128xf32>
      %cst_25 = arith.constant dense<0.000000e+00> : vector<1xf32>
      %48 = vector.multi_reduction <add>, %47, %cst_25 [1, 2] : vector<1x8x128xf32> to vector<1xf32>
      %49 = vector.shape_cast %48 : vector<1xf32> to vector<1x1x1xf32>
      %50 = vector.extract %49[0, 0, 0] : f32 from vector<1x1x1xf32>
      %51 = arith.divf %45, %50 : f32
      %c0_26 = arith.constant 0 : index
      %c0_27 = arith.constant 0 : index
      %52 = memref.load %arg4[%c0_26, %c0_27] : memref<1x1xf32, #tpu.memory_space<smem>>
      memref.store %51, %arg4[%c0_26, %c0_27] : memref<1x1xf32, #tpu.memory_space<smem>>
    } else {
    }
    return
  }
  func.func @transform_0(%arg0: i32) -> (i32, i32) {
    %c0_i32 = arith.constant 0 : i32
    %c0_i32_0 = arith.constant 0 : i32
    return %arg0, %c0_i32 : i32, i32
  }
  func.func @transform_1(%arg0: i32) -> (i32, i32) {
    %c0_i32 = arith.constant 0 : i32
    %c0_i32_0 = arith.constant 0 : i32
    return %arg0, %c0_i32 : i32, i32
  }
  func.func @transform_2(%arg0: i32) -> (i32, i32) {
    %c0_i32 = arith.constant 0 : i32
    %c0_i32_0 = arith.constant 0 : i32
    return %arg0, %c0_i32 : i32, i32
  }
  func.func @transform_3(%arg0: i32) -> (i32, i32) {
    %c0_i32 = arith.constant 0 : i32
    %c0_i32_0 = arith.constant 0 : i32
    %c0_i32_1 = arith.constant 0 : i32
    return %c0_i32, %c0_i32_0 : i32, i32
  }
}

</mosaic_0001>

<llo_original>
// kernel: tpu_custom_call.1
$region0: #{tpu_custom_call.1}
  #allocation0 [shape = 'u32[]', space=smem, size = 0x4, offset = 0x4, fixed_abs, tag = 'smem constant byte address 0x4 - core index']
  #allocation1 [shape = 'u32[144,128]{1,0:T(1,128)}', space=vmem, size = 0x12000, scoped, tag = 'internal scratch']
  #allocation2 [shape = 'f32[8,128]{1,0:T(8,128)}', space=vmem, size = 0x1000, scoped, tag = 'scratch operand']
  #allocation3 [shape = 'f32[8,128]{1,0:T(8,128)}', space=vmem, size = 0x1000, scoped, tag = 'scratch operand']
  %s0 = inlined_call_operand.hbm [shape: f32[8,128], index: 0, kind: input, shape index: {}]
  %s1 = inlined_call_operand.hbm [shape: f32[8,128], index: 1, kind: input, shape index: {}]
  %s2 = inlined_call_operand.hbm [shape: f32[8,128], index: 2, kind: input, shape index: {}]
  %s3 = inlined_call_operand.hbm [shape: f32[1,1], index: 3, kind: output, shape index: {}]
  %s4 = sld [smem:[#allocation0]]
  $region42: #{tpu_custom_call.1} parent=0
    _
  %s6 = ssub.s32 1, %s4
  %s7 = scalar_select 0, %s6, %s4
  $region1: #{tpu_custom_call.1} parent=0
    #allocation4 [shape = 'u8[4096]{0}', space=vmem, size = 0x1000, scoped, tag = 'input window, operand 0, single buffered']
    #allocation5 [shape = 's32[1]{0}', space=sflag, size = 0x4, scoped, tag = 'scoped memory for tpu_custom_call.1']
    #allocation6 [shape = 's32[1]{0}', space=sflag, size = 0x4, scoped, tag = 'scoped memory for tpu_custom_call.1']
    #allocation7 [shape = 'u8[4096]{0}', space=vmem, size = 0x1000, scoped, tag = 'input window, operand 1, single buffered']
    #allocation8 [shape = 's32[1]{0}', space=sflag, size = 0x4, scoped, tag = 'scoped memory for tpu_custom_call.1']
    #allocation9 [shape = 'u8[4096]{0}', space=vmem, size = 0x1000, scoped, tag = 'input window, operand 2, single buffered']
    #allocation10 [shape = 'u8[512]{0}', space=smem, size = 0x200, scoped, tag = 'output window, operand 0, single buffered']
    %8 = vsyncpa [#allocation5], 0
    %9 = vsyncpa [#allocation8], 0
    %10 = vsyncpa [#allocation6], 0
    // Predicated region
    $region2: #{tpu_custom_call.1} parent=1 // pred_check
      _
    $region3: #{tpu_custom_call.1} parent=1 // pred_check_branch
      %12 = sbr.rel (0) target = $region5
    $region4: #{tpu_custom_call.1} parent=1 // pred_region
      %s14 = ssub.s32 128, 128
      %15 = vsyncadd [#allocation5], %s14
      %s17 = sshll.u32 [#allocation4], 4
      %s18 = int_to_ptr.vmem [resolvable:$true] %s17
      %20 = dma.hbm_to_vmem [thread:$0]  %s0, 128, %s18, [#allocation5]
    $region5: #{tpu_custom_call.1} parent=1 // pred_fallthru
      _
    // Predicated region
    $region6: #{tpu_custom_call.1} parent=1 // pred_check
      _
    $region7: #{tpu_custom_call.1} parent=1 // pred_check_branch
      %22 = sbr.rel (0) target = $region9
    $region8: #{tpu_custom_call.1} parent=1 // pred_region
      %s24 = ssub.s32 128, 128
      %25 = vsyncadd [#allocation8], %s24
      %s27 = sshll.u32 [#allocation7], 4
      %s28 = int_to_ptr.vmem [resolvable:$true] %s27
      %30 = dma.hbm_to_vmem [thread:$0]  %s1, 128, %s28, [#allocation8]
    $region9: #{tpu_custom_call.1} parent=1 // pred_fallthru
      _
    // Predicated region
    $region10: #{tpu_custom_call.1} parent=1 // pred_check
      _
    $region11: #{tpu_custom_call.1} parent=1 // pred_check_branch
      %32 = sbr.rel (0) target = $region13
    $region12: #{tpu_custom_call.1} parent=1 // pred_region
      %s34 = ssub.s32 128, 128
      %35 = vsyncadd [#allocation8], %s34
      %s37 = sshll.u32 [#allocation9], 4
      %s38 = int_to_ptr.vmem [resolvable:$true] %s37
      %40 = dma.hbm_to_vmem [thread:$0]  %s2, 128, %s38, [#allocation8]
    $region13: #{tpu_custom_call.1} parent=1 // pred_fallthru
      _
    // Predicated region
    $region14: #{tpu_custom_call.1} parent=1 // pred_check
      _
    $region15: #{tpu_custom_call.1} parent=1 // pred_check_branch
      %42 = sbr.rel (0) target = $region17
    $region16: #{tpu_custom_call.1} parent=1 // pred_region
      %43 = dma.done [#allocation5], 128
    $region17: #{tpu_custom_call.1} parent=1 // pred_fallthru
      _
    // Predicated region
    $region18: #{tpu_custom_call.1} parent=1 // pred_check
      _
    $region19: #{tpu_custom_call.1} parent=1 // pred_check_branch
      %45 = sbr.rel (0) target = $region21
    $region20: #{tpu_custom_call.1} parent=1 // pred_region
      %46 = dma.done [#allocation8], 128
    $region21: #{tpu_custom_call.1} parent=1 // pred_fallthru
      _
    // Predicated region
    $region22: #{tpu_custom_call.1} parent=1 // pred_check
      _
    $region23: #{tpu_custom_call.1} parent=1 // pred_check_branch
      %48 = sbr.rel (0) target = $region25
    $region24: #{tpu_custom_call.1} parent=1 // pred_region
      %49 = dma.done [#allocation8], 128
    $region25: #{tpu_custom_call.1} parent=1 // pred_fallthru
      _
    %p50 = scmp.eq.s32.totalorder 0, 0
    // Predicated region
    $region26: #{tpu_custom_call.1} parent=1 // pred_check
      %p51 = pneg %p50
    $region27: #{tpu_custom_call.1} parent=1 // pred_check_branch
      %53 = sbr.rel (%p51) target = $region29
    $region28: #{tpu_custom_call.1} parent=1 // pred_region
      %54 = vst [vmem:[#allocation2] sm:$0xff] 0.0
      %55 = vst [vmem:[#allocation3] sm:$0xff] 0.0
    $region29: #{tpu_custom_call.1} parent=1 // pred_fallthru
      _
    %v56 = vld [vmem:[#allocation4] sm:$0xff]
    %v57 = vld [vmem:[#allocation7] sm:$0xff]
    %v58 = vld [vmem:[#allocation9] sm:$0xff]
    %v59 = vmul.f32 %v56, %v58
    %v60 = vmax.f32 %v59, 0.0
    %v61 = vmul.f32 %v59, %v57
    %v62 = vsub.f32 %v60, %v61
    %v63 = vand.u32 2147483647, %v59
    %v64 = vsub.f32 0.0, %v63
    %v65 = vmul.f32 %v64, 1.442695
    %v66 = vpow.pop %v65
    %v67 = vadd.f32 %v66, 1.0
    %v68 = vlog2.pop %v67
    %v69 = vmul.f32 %v68, 0.6931472
    %v70 = vmul.f32 -0.5, %v66
    %v71 = vadd.f32 %v70, 1.0
    %v72 = vmul.f32 %v71, %v66
    %v73 = vand.u32 2147483647, %v66
    %vm74 = vcmp.lt.f32.partialorder %v73, 0.0004427343
    %v75 = vsel %vm74, %v72, %v69
    %v76 = vadd.f32 %v62, %v75
    %v77 = vlaneseq
    %v78 = vshrl.u32 %v77, 7
    %v79 = vlaneseq
    %v80 = vand.u32 %v79, 127
    %v81 = vmul.u32 %v78, 128
    %v82 = vadd.s32 %v81, %v80
    %s83 = smul.u32 0, 1024
    %s84 = ssub.s32 16, %s83
    %v85 = vstv %s84
    %vm86 = vcmp.lt.s32.totalorder %v82, %v85
    %v87 = vsel %vm86, %v76, 0.0
    %v88 = vld [vmem:[#allocation2] sm:$0xff]
    %v89 = vadd.f32 %v87, 0.0
    %v90 = vadd.f32 %v88, %v89
    %91 = vst [vmem:[#allocation2] sm:$0xff] %v90
    %v92 = vld [vmem:[#allocation3] sm:$0xff]
    %v93 = vadd.f32 %v58, 0.0
    %v94 = vadd.f32 %v92, %v93
    %95 = vst [vmem:[#allocation3] sm:$0xff] %v94
    // Predicated region
    $region30: #{tpu_custom_call.1} parent=1 // pred_check
      %p96 = pneg %p50
    $region31: #{tpu_custom_call.1} parent=1 // pred_check_branch
      %98 = sbr.rel (%p96) target = $region33
    $region32: #{tpu_custom_call.1} parent=1 // pred_region
      %v99 = vld [vmem:[#allocation2] sm:$0xff]
      %100 = vadd.xlane.f32.xlu0 %v99
      %v101 = vpop.xlane.xlu0 %100
      %v102 = vrot.slane %v101, 4
      %v103 = vadd.f32 %v101, %v102
      %v104 = vrot.slane %v103, 2
      %v105 = vadd.f32 %v103, %v104
      %v106 = vrot.slane %v105, 1
      %v107 = vadd.f32 %v105, %v106
      %s108 = vtos %v107
      %v109 = vld [vmem:[#allocation3] sm:$0xff]
      %110 = vadd.xlane.f32.xlu0 %v109
      %v111 = vpop.xlane.xlu0 %110
      %v112 = vrot.slane %v111, 4
      %v113 = vadd.f32 %v111, %v112
      %v114 = vrot.slane %v113, 2
      %v115 = vadd.f32 %v113, %v114
      %v116 = vrot.slane %v115, 1
      %v117 = vadd.f32 %v115, %v116
      %s118 = vtos %v117
      %v119 = vstv %s118
      %v120 = vrcp.pop %v119
      %s121 = vtos %v120
      %s122 = smul.f32 %s108, %s121
      %s123 = scalar_lea.smem [#allocation10], 0
      %124 = sst [smem:[%s123]] %s122
    $region33: #{tpu_custom_call.1} parent=1 // pred_fallthru
      _
    // Predicated region
    $region34: #{tpu_custom_call.1} parent=1 // pred_check
      _
    $region35: #{tpu_custom_call.1} parent=1 // pred_check_branch
      %126 = sbr.rel (0) target = $region37
    $region36: #{tpu_custom_call.1} parent=1 // pred_region
      %s128 = ssub.s32 16, 16
      %129 = vsyncadd [#allocation6], %s128
      %132 = dma.smem_to_hbm [#allocation10], 16, %s3, [#allocation6]
    $region37: #{tpu_custom_call.1} parent=1 // pred_fallthru
      _
    // Predicated region
    $region38: #{tpu_custom_call.1} parent=1 // pred_check
      _
    $region39: #{tpu_custom_call.1} parent=1 // pred_check_branch
      %134 = sbr.rel (0) target = $region41
    $region40: #{tpu_custom_call.1} parent=1 // pred_region
      %135 = dma.done [#allocation6], 16
    $region41: #{tpu_custom_call.1} parent=1 // pred_fallthru
      _
    %136 = sfence
    %137 = vsyncpa [#allocation5], 1
    %138 = vsyncpa [#allocation8], 1
    %139 = vsyncpa [#allocation6], 1

</llo_original>
